<compile_context>
chip_gen: v6e
topology: v6e:2x2x1
jax: 0.10.0
libtpu: 0.0.40
codegen_flags: <defaults>
</compile_context>

<pallas_src>
import jax
import jax.numpy as jnp
from jax.experimental import pallas as pl
from jax.experimental.pallas import tpu as pltpu


def net_kernel(obs_ref, act_ref, w1o_ref, w1a_ref, b1_ref, w2_ref, b2_ref, o_ref):
    # fc_in with the concat fused: h = obs @ W1_obs + act @ W1_act + b1  (MXU, f32 acc)
    h = jnp.dot(obs_ref[...], w1o_ref[...], preferred_element_type=jnp.float32)
    h = h + jnp.dot(act_ref[...], w1a_ref[...], preferred_element_type=jnp.float32)
    h = jnp.maximum(h + b1_ref[...], 0.0)                  # bias + ReLU on the VPU

    # fc_out (output width 1): VPU multiply + XLU lane reduction instead of an
    # MXU matmul that would only populate a single result column.
    out = jnp.sum(h * w2_ref[...], axis=-1) + b2_ref[0]    # (TILE_B,)

    # Lane-dense store: batch lives on the lane axis of a (1, 1, TILE_B) row.
    o_ref[...] = out[None, None, :].astype(o_ref.dtype)


def net_forward(obs, act, w1, b1, w2, b2, *, tile_b=None):
    """obs: (B, OBS_DIM), act: (B, ACT_DIM); w1: (OBS+ACT, H), b1: (1, H),
    w2: (H, 1), b2: (1, 1).  Returns (B, 1) float32, matching the torch module."""
    B, obs_dim = obs.shape
    act_dim = act.shape[1]
    n_hidden = w1.shape[1]

    # Adaptive batch tile: {128, 256, 512}. Bigger tiles amortize per-grid-step
    # overhead for large batches; everything stays far under the VMEM limit.
    if tile_b is None:
        tile_b = min(512, max(128, pl.next_power_of_2(B)))

    # Fuse torch.cat by splitting W1 (free static slices in the wrapper).
    w1_obs = w1[:obs_dim, :]
    w1_act = w1[obs_dim:, :]
    b1_row = b1.reshape(1, n_hidden)
    w2_row = w2.reshape(1, n_hidden)        # second layer as a broadcast row
    b2_s = b2.reshape((1,))                 # scalar bias -> SMEM

    # Pad the batch up to a multiple of tile_b; tail rows are computed and dropped.
    grid_b = pl.cdiv(B, tile_b)
    b_pad = grid_b * tile_b
    if b_pad != B:
        obs = jnp.pad(obs, ((0, b_pad - B), (0, 0)))
        act = jnp.pad(act, ((0, b_pad - B), (0, 0)))

    flops = 2 * b_pad * (obs_dim + act_dim) * n_hidden + 2 * b_pad * n_hidden
    bytes_accessed = 4 * (
        b_pad * (obs_dim + act_dim)          # activations in
        + (obs_dim + act_dim + 2) * n_hidden # weights + biases
        + 1                                  # b2
        + b_pad                              # output
    )

    out = pl.pallas_call(
        net_kernel,
        out_shape=jax.ShapeDtypeStruct((grid_b, 1, tile_b), jnp.float32),
        grid=(grid_b,),
        in_specs=[
            pl.BlockSpec((tile_b, obs_dim), lambda i: (i, 0)),        # obs tile
            pl.BlockSpec((tile_b, act_dim), lambda i: (i, 0)),        # act tile
            pl.BlockSpec((obs_dim, n_hidden), lambda i: (0, 0)),      # W1_obs (resident)
            pl.BlockSpec((act_dim, n_hidden), lambda i: (0, 0)),      # W1_act (resident)
            pl.BlockSpec((1, n_hidden), lambda i: (0, 0)),            # b1 row (resident)
            pl.BlockSpec((1, n_hidden), lambda i: (0, 0)),            # W2 row (resident)
            pl.BlockSpec(memory_space=pltpu.MemorySpace.SMEM),        # b2 scalar
        ],
        out_specs=pl.BlockSpec((1, 1, tile_b), lambda i: (i, 0, 0)),  # lane-dense slab
        compiler_params=pltpu.CompilerParams(
            dimension_semantics=("parallel",),   # batch tiles shard across TCs on v7x
        ),
        cost_estimate=pl.CostEstimate(
            flops=flops, transcendentals=0, bytes_accessed=bytes_accessed
        ),
    )(obs, act, w1_obs, w1_act, b1_row, w2_row, b2_s)

    # (grid_b, 1, tile_b) lane-dense slab  ->  (B, 1) column, matching torch layout.
    return out.reshape(b_pad, 1)[:B]


def reference_forward(obs, act, w1, b1, w2, b2):
    x = jnp.concatenate([obs, act], axis=1)
    h = jnp.maximum(x @ w1 + b1, 0.0)
    return h @ w2 + b2


if __name__ == "__main__":
    # Small shapes consistent with the module: obs_dim + act_dim = N_INPUT.
    # (act_renorm in the torch module is unused in forward -> nothing to translate.)
    B, OBS_DIM, ACT_DIM, N_HIDDEN = 8, 12, 4, 32
    N_INPUT = OBS_DIM + ACT_DIM

    key = jax.random.PRNGKey(0)
    k_obs, k_act, k_w1, k_b1, k_w2, k_b2 = jax.random.split(key, 6)

    obs = jax.random.normal(k_obs, (B, OBS_DIM), dtype=jnp.float32)
    act = jax.random.normal(k_act, (B, ACT_DIM), dtype=jnp.float32)

    # Deterministic parameter init (PyTorch Linear-style uniform bounds),
    # stored as [in, out] so the math is x @ W + b.
    bound1 = 1.0 / jnp.sqrt(jnp.float32(N_INPUT))
    w1 = jax.random.uniform(k_w1, (N_INPUT, N_HIDDEN), jnp.float32, -bound1, bound1)
    b1 = jax.random.uniform(k_b1, (1, N_HIDDEN), jnp.float32, -bound1, bound1)

    bound2 = 1.0 / jnp.sqrt(jnp.float32(N_HIDDEN))
    w2 = jax.random.uniform(k_w2, (N_HIDDEN, 1), jnp.float32, -bound2, bound2)
    b2 = jax.random.uniform(k_b2, (1, 1), jnp.float32, -bound2, bound2)

    out = jax.block_until_ready(net_forward(obs, act, w1, b1, w2, b2))

    ref = reference_forward(obs, act, w1, b1, w2, b2)
    assert out.shape == (B, 1), out.shape
    assert jnp.allclose(out, ref, atol=1e-5, rtol=1e-5), (out, ref)

    print("KERNEL_OK")
</pallas_src>

<mosaic_0001>
module attributes {stable_mosaic.version = 11 : i64} {
  func.func @net_kernel(%arg0: i32, %arg1: memref<128x12xf32, #tpu.memory_space<vmem>>, %arg2: memref<128x4xf32, #tpu.memory_space<vmem>>, %arg3: memref<12x32xf32, #tpu.memory_space<vmem>>, %arg4: memref<4x32xf32, #tpu.memory_space<vmem>>, %arg5: memref<1x32xf32, #tpu.memory_space<vmem>>, %arg6: memref<1x32xf32, #tpu.memory_space<vmem>>, %arg7: memref<1xf32, #tpu.memory_space<smem>>, %arg8: memref<1x1x128xf32, #tpu.memory_space<vmem>>) attributes {dimension_semantics = [#tpu.dimension_semantics<parallel>], iteration_bounds = array<i64: 1>, scalar_prefetch = 0 : i64, scratch_operands = 0 : i64, tpu.core_type = #tpu.core_type<tc>, window_params = [{transform_indices = @transform_0, window_bounds = array<i64: 128, 12>}, {transform_indices = @transform_1, window_bounds = array<i64: 128, 4>}, {pipeline_mode = #tpu.pipeline_mode<synchronous>, transform_indices = @transform_2, window_bounds = array<i64: 12, 32>}, {pipeline_mode = #tpu.pipeline_mode<synchronous>, transform_indices = @transform_3, window_bounds = array<i64: 4, 32>}, {pipeline_mode = #tpu.pipeline_mode<synchronous>, transform_indices = @transform_4, window_bounds = array<i64: 1, 32>}, {pipeline_mode = #tpu.pipeline_mode<synchronous>, transform_indices = @transform_5, window_bounds = array<i64: 1, 32>}, {transform_indices = @transform_6, window_bounds = array<i64: 1>}, {transform_indices = @transform_7, window_bounds = array<i64: 1, 1, 128>}]} {
    %c0 = arith.constant 0 : index
    %c0_0 = arith.constant 0 : index
    %0 = vector.load %arg1[%c0, %c0_0] : memref<128x12xf32, #tpu.memory_space<vmem>>, vector<128x12xf32>
    %c0_1 = arith.constant 0 : index
    %c0_2 = arith.constant 0 : index
    %1 = vector.load %arg3[%c0_1, %c0_2] : memref<12x32xf32, #tpu.memory_space<vmem>>, vector<12x32xf32>
    %cst = arith.constant dense<0.000000e+00> : vector<128x32xf32>
    %2 = tpu.matmul %0, %1, %cst {dimension_numbers = #tpu.dot_dimension_numbers<[1], [0], [0], [1], [0, 0, 1, 1], [], []>} : vector<128x12xf32>, vector<12x32xf32>, vector<128x32xf32> -> vector<128x32xf32>
    %c0_3 = arith.constant 0 : index
    %c0_4 = arith.constant 0 : index
    %3 = vector.load %arg2[%c0_3, %c0_4] : memref<128x4xf32, #tpu.memory_space<vmem>>, vector<128x4xf32>
    %c0_5 = arith.constant 0 : index
    %c0_6 = arith.constant 0 : index
    %4 = vector.load %arg4[%c0_5, %c0_6] : memref<4x32xf32, #tpu.memory_space<vmem>>, vector<4x32xf32>
    %cst_7 = arith.constant dense<0.000000e+00> : vector<128x32xf32>
    %5 = tpu.matmul %3, %4, %cst_7 {dimension_numbers = #tpu.dot_dimension_numbers<[1], [0], [0], [1], [0, 0, 1, 1], [], []>} : vector<128x4xf32>, vector<4x32xf32>, vector<128x32xf32> -> vector<128x32xf32>
    %6 = arith.addf %2, %5 : vector<128x32xf32>
    %c0_8 = arith.constant 0 : index
    %c0_9 = arith.constant 0 : index
    %7 = vector.load %arg5[%c0_8, %c0_9] : memref<1x32xf32, #tpu.memory_space<vmem>>, vector<1x32xf32>
    %8 = vector.broadcast %7 : vector<1x32xf32> to vector<128x32xf32>
    %9 = arith.addf %6, %8 : vector<128x32xf32>
    %cst_10 = arith.constant 0.000000e+00 : f32
    %10 = vector.broadcast %cst_10 : f32 to vector<128x32xf32>
    %11 = arith.maximumf %9, %10 : vector<128x32xf32>
    %c0_11 = arith.constant 0 : index
    %c0_12 = arith.constant 0 : index
    %12 = vector.load %arg6[%c0_11, %c0_12] : memref<1x32xf32, #tpu.memory_space<vmem>>, vector<1x32xf32>
    %13 = vector.broadcast %12 : vector<1x32xf32> to vector<128x32xf32>
    %14 = arith.mulf %11, %13 : vector<128x32xf32>
    %cst_13 = arith.constant dense<0.000000e+00> : vector<128xf32>
    %15 = vector.multi_reduction <add>, %14, %cst_13 [1] : vector<128x32xf32> to vector<128xf32>
    %c0_14 = arith.constant 0 : index
    %16 = memref.load %arg7[%c0_14] : memref<1xf32, #tpu.memory_space<smem>>
    %17 = vector.broadcast %16 : f32 to vector<128xf32>
    %18 = arith.addf %15, %17 : vector<128xf32>
    %19 = vector.shape_cast %18 : vector<128xf32> to vector<1x1x128xf32>
    %c0_15 = arith.constant 0 : index
    %c0_16 = arith.constant 0 : index
    %c0_17 = arith.constant 0 : index
    %20 = vector.load %arg8[%c0_15, %c0_16, %c0_17] : memref<1x1x128xf32, #tpu.memory_space<vmem>>, vector<1x1x128xf32>
    tpu.vector_store %arg8[%c0_15, %c0_16, %c0_17], %19 {strides = array<i32>} : memref<1x1x128xf32, #tpu.memory_space<vmem>>, vector<1x1x128xf32>,
    return
  }
  func.func @transform_0(%arg0: i32) -> (i32, i32) {
    %c0_i32 = arith.constant 0 : i32
    %c0_i32_0 = arith.constant 0 : i32
    return %arg0, %c0_i32 : i32, i32
  }
  func.func @transform_1(%arg0: i32) -> (i32, i32) {
    %c0_i32 = arith.constant 0 : i32
    %c0_i32_0 = arith.constant 0 : i32
    return %arg0, %c0_i32 : i32, i32
  }
  func.func @transform_2(%arg0: i32) -> (i32, i32) {
    %c0_i32 = arith.constant 0 : i32
    %c0_i32_0 = arith.constant 0 : i32
    %c0_i32_1 = arith.constant 0 : i32
    return %c0_i32, %c0_i32_0 : i32, i32
  }
  func.func @transform_3(%arg0: i32) -> (i32, i32) {
    %c0_i32 = arith.constant 0 : i32
    %c0_i32_0 = arith.constant 0 : i32
    %c0_i32_1 = arith.constant 0 : i32
    return %c0_i32, %c0_i32_0 : i32, i32
  }
  func.func @transform_4(%arg0: i32) -> (i32, i32) {
    %c0_i32 = arith.constant 0 : i32
    %c0_i32_0 = arith.constant 0 : i32
    %c0_i32_1 = arith.constant 0 : i32
    return %c0_i32, %c0_i32_0 : i32, i32
  }
  func.func @transform_5(%arg0: i32) -> (i32, i32) {
    %c0_i32 = arith.constant 0 : i32
    %c0_i32_0 = arith.constant 0 : i32
    %c0_i32_1 = arith.constant 0 : i32
    return %c0_i32, %c0_i32_0 : i32, i32
  }
  func.func @transform_6(%arg0: i32) -> i32 {
    %c0_i32 = arith.constant 0 : i32
    %c0_i32_0 = arith.constant 0 : i32
    return %c0_i32 : i32
  }
  func.func @transform_7(%arg0: i32) -> (i32, i32, i32) {
    %c0_i32 = arith.constant 0 : i32
    %c0_i32_0 = arith.constant 0 : i32
    %c0_i32_1 = arith.constant 0 : i32
    return %arg0, %c0_i32, %c0_i32_0 : i32, i32, i32
  }
}

</mosaic_0001>

<llo_original>
// kernel: tpu_custom_call.1
$region0: #{tpu_custom_call.1}
  #allocation0 [shape = 'u32[]', space=smem, size = 0x4, offset = 0x4, fixed_abs, tag = 'smem constant byte address 0x4 - core index']
  #allocation1 [shape = 'u32[144,128]{1,0:T(1,128)}', space=vmem, size = 0x12000, scoped, tag = 'internal scratch']
  #allocation2 [shape = 'f32[1]{0:T(128)S(6)}', space=smem, size = 0x200, scoped, tag = 'scoped memory for tpu_custom_call.1']
  %s0 = inlined_call_operand.vmem [shape: f32[128,12], index: 0, kind: input, shape index: {}]
  %s1 = inlined_call_operand.vmem [shape: f32[128,4], index: 1, kind: input, shape index: {}]
  %s2 = inlined_call_operand.vmem [shape: f32[12,32], index: 2, kind: input, shape index: {}]
  %s3 = inlined_call_operand.vmem [shape: f32[4,32], index: 3, kind: input, shape index: {}]
  %s4 = inlined_call_operand.vmem [shape: f32[1,32], index: 4, kind: input, shape index: {}]
  %s5 = inlined_call_operand.vmem [shape: f32[1,32], index: 5, kind: input, shape index: {}]
  %s6 = inlined_call_operand.<no memory space> [shape: f32[1], index: 6, kind: input, shape index: {}]
  %s7 = inlined_call_operand.hbm [shape: f32[1,1,128], index: 7, kind: output, shape index: {}]
  %s8 = sld [smem:[#allocation0]]
  $region38: #{tpu_custom_call.1} parent=0
    _
  %s10 = ssub.s32 1, %s8
  %s11 = scalar_select 0, %s10, %s8
  %12 = sst [smem:[#allocation2]] %s6
  $region1: #{tpu_custom_call.1} parent=0
    #allocation3 [shape = 'u8[512]{0}', space=vmem, size = 0x400, scoped, tag = 'output window, operand 0, single buffered']
    #allocation4 [shape = 's32[1]{0}', space=sflag, size = 0x4, scoped, tag = 'scoped memory for tpu_custom_call.1']
    %13 = vsyncpa [#allocation4], 0
    // Predicated region
    $region2: #{tpu_custom_call.1} parent=1 // pred_check
      _
    $region3: #{tpu_custom_call.1} parent=1 // pred_check_branch
      %15 = sbr.rel (0) target = $region5
    $region4: #{tpu_custom_call.1} parent=1 // pred_region
      _
    $region5: #{tpu_custom_call.1} parent=1 // pred_fallthru
      _
    // Predicated region
    $region6: #{tpu_custom_call.1} parent=1 // pred_check
      _
    $region7: #{tpu_custom_call.1} parent=1 // pred_check_branch
      %17 = sbr.rel (0) target = $region9
    $region8: #{tpu_custom_call.1} parent=1 // pred_region
      _
    $region9: #{tpu_custom_call.1} parent=1 // pred_fallthru
      _
    // Predicated region
    $region10: #{tpu_custom_call.1} parent=1 // pred_check
      _
    $region11: #{tpu_custom_call.1} parent=1 // pred_check_branch
      %19 = sbr.rel (0) target = $region13
    $region12: #{tpu_custom_call.1} parent=1 // pred_region
      _
    $region13: #{tpu_custom_call.1} parent=1 // pred_fallthru
      _
    // Predicated region
    $region14: #{tpu_custom_call.1} parent=1 // pred_check
      _
    $region15: #{tpu_custom_call.1} parent=1 // pred_check_branch
      %21 = sbr.rel (0) target = $region17
    $region16: #{tpu_custom_call.1} parent=1 // pred_region
      _
    $region17: #{tpu_custom_call.1} parent=1 // pred_fallthru
      _
    // Predicated region
    $region18: #{tpu_custom_call.1} parent=1 // pred_check
      _
    $region19: #{tpu_custom_call.1} parent=1 // pred_check_branch
      %23 = sbr.rel (0) target = $region21
    $region20: #{tpu_custom_call.1} parent=1 // pred_region
      _
    $region21: #{tpu_custom_call.1} parent=1 // pred_fallthru
      _
    // Predicated region
    $region22: #{tpu_custom_call.1} parent=1 // pred_check
      _
    $region23: #{tpu_custom_call.1} parent=1 // pred_check_branch
      %25 = sbr.rel (0) target = $region25
    $region24: #{tpu_custom_call.1} parent=1 // pred_region
      _
    $region25: #{tpu_custom_call.1} parent=1 // pred_fallthru
      _
    // Predicated region
    $region26: #{tpu_custom_call.1} parent=1 // pred_check
      _
    $region27: #{tpu_custom_call.1} parent=1 // pred_check_branch
      %27 = sbr.rel (0) target = $region29
    $region28: #{tpu_custom_call.1} parent=1 // pred_region
      _
    $region29: #{tpu_custom_call.1} parent=1 // pred_fallthru
      _
    %v28 = vld [vmem:[%s0] sm:$0xff]
    %v29 = vld [vmem:[%s0 + $0x8] sm:$0xff]
    %v30 = vld [vmem:[%s0 + $0x10] sm:$0xff]
    %v31 = vld [vmem:[%s0 + $0x18] sm:$0xff]
    %v32 = vld [vmem:[%s0 + $0x20] sm:$0xff]
    %v33 = vld [vmem:[%s0 + $0x28] sm:$0xff]
    %v34 = vld [vmem:[%s0 + $0x30] sm:$0xff]
    %v35 = vld [vmem:[%s0 + $0x38] sm:$0xff]
    %v36 = vld [vmem:[%s0 + $0x40] sm:$0xff]
    %v37 = vld [vmem:[%s0 + $0x48] sm:$0xff]
    %v38 = vld [vmem:[%s0 + $0x50] sm:$0xff]
    %v39 = vld [vmem:[%s0 + $0x58] sm:$0xff]
    %v40 = vld [vmem:[%s0 + $0x60] sm:$0xff]
    %v41 = vld [vmem:[%s0 + $0x68] sm:$0xff]
    %v42 = vld [vmem:[%s0 + $0x70] sm:$0xff]
    %v43 = vld [vmem:[%s0 + $0x78] sm:$0xff]
    %v44 = vld [vmem:[%s2] sm:$0xff]
    %v45 = vld [vmem:[%s2 + $0x8] sm:$0xf]
    %v46 = vld [vmem:[%s1] sm:$0xff]
    %v47 = vld [vmem:[%s1 + $0x8] sm:$0xff]
    %v48 = vld [vmem:[%s1 + $0x10] sm:$0xff]
    %v49 = vld [vmem:[%s1 + $0x18] sm:$0xff]
    %v50 = vld [vmem:[%s1 + $0x20] sm:$0xff]
    %v51 = vld [vmem:[%s1 + $0x28] sm:$0xff]
    %v52 = vld [vmem:[%s1 + $0x30] sm:$0xff]
    %v53 = vld [vmem:[%s1 + $0x38] sm:$0xff]
    %v54 = vld [vmem:[%s1 + $0x40] sm:$0xff]
    %v55 = vld [vmem:[%s1 + $0x48] sm:$0xff]
    %v56 = vld [vmem:[%s1 + $0x50] sm:$0xff]
    %v57 = vld [vmem:[%s1 + $0x58] sm:$0xff]
    %v58 = vld [vmem:[%s1 + $0x60] sm:$0xff]
    %v59 = vld [vmem:[%s1 + $0x68] sm:$0xff]
    %v60 = vld [vmem:[%s1 + $0x70] sm:$0xff]
    %v61 = vld [vmem:[%s1 + $0x78] sm:$0xff]
    %v62 = vld [vmem:[%s3] sm:$0xf]
    %vm63 = vcmask 31744
    %v65 = vsel %vm63, %v46, 0
    %v68 = vsel %vm63, %v47, 0
    %v71 = vsel %vm63, %v48, 0
    %v74 = vsel %vm63, %v49, 0
    %v77 = vsel %vm63, %v50, 0
    %v80 = vsel %vm63, %v51, 0
    %v83 = vsel %vm63, %v52, 0
    %v86 = vsel %vm63, %v53, 0
    %v89 = vsel %vm63, %v54, 0
    %v92 = vsel %vm63, %v55, 0
    %v95 = vsel %vm63, %v56, 0
    %v98 = vsel %vm63, %v57, 0
    %v101 = vsel %vm63, %v58, 0
    %v104 = vsel %vm63, %v59, 0
    %v107 = vsel %vm63, %v60, 0
    %v110 = vsel %vm63, %v61, 0
    %vm112 = vcmask 1043456
    %v114 = vsel %vm112, %v62, 0
    %116 = vmatprep.subr.mxu0 0.0
    %117 = vmatpush1.msra.mxu0 0.0
    %118 = vmatprep.subr.mxu0 0.0
    %119 = vmatpush1.msra.mxu0 0.0
    %120 = vmatprep.subr.mxu0 0.0
    %121 = vmatpush1.msra.mxu0 0.0
    %122 = vmatprep.subr.mxu0 0.0
    %123 = vmatpush1.msra.mxu0 0.0
    %124 = vmatprep.subr.mxu0 0.0
    %125 = vmatpush1.msra.mxu0 0.0
    %126 = vmatprep.subr.mxu0 0.0
    %127 = vmatpush1.msra.mxu0 0.0
    %128 = vmatprep.subr.mxu0 0.0
    %129 = vmatpush1.msra.mxu0 0.0
    %130 = vmatprep.subr.mxu0 0.0
    %131 = vmatpush1.msra.mxu0 0.0
    %132 = vmatprep.subr.mxu0 0.0
    %133 = vmatpush1.msra.mxu0 0.0
    %134 = vmatprep.subr.mxu0 0.0
    %135 = vmatpush1.msra.mxu0 0.0
    %136 = vmatprep.subr.mxu0 0.0
    %137 = vmatpush1.msra.mxu0 0.0
    %138 = vmatprep.subr.mxu0 0.0
    %139 = vmatpush1.msra.mxu0 0.0
    %140 = vmatprep.subr.mxu0 0.0
    %141 = vmatpush1.msra.mxu0 0.0
    %142 = vmatprep.subr.mxu0 0.0
    %143 = vmatpush1.msra.mxu0 0.0
    %144 = vmatprep.subr.mxu0 0.0
    %145 = vmatpush1.msra.mxu0 0.0
    %146 = vmatprep.subr.mxu0 0.0
    %147 = vmatpush1.msra.mxu0 %v114
    %148 = vmatprep.subr.mxu0 0.0
    %149 = vmatpush2.msra.mxu0 0.0
    %150 = vmatprep.subr.mxu0 0.0
    %151 = vmatpush2.msra.mxu0 0.0
    %152 = vmatprep.subr.mxu0 0.0
    %153 = vmatpush2.msra.mxu0 0.0
    %154 = vmatprep.subr.mxu0 0.0
    %155 = vmatpush2.msra.mxu0 0.0
    %156 = vmatprep.subr.mxu0 0.0
    %157 = vmatpush2.msra.mxu0 0.0
    %158 = vmatprep.subr.mxu0 0.0
    %159 = vmatpush2.msra.mxu0 0.0
    %160 = vmatprep.subr.mxu0 0.0
    %161 = vmatpush2.msra.mxu0 0.0
    %162 = vmatprep.subr.mxu0 0.0
    %163 = vmatpush2.msra.mxu0 0.0
    %164 = vmatprep.subr.mxu0 0.0
    %165 = vmatpush2.msra.mxu0 0.0
    %166 = vmatprep.subr.mxu0 0.0
    %167 = vmatpush2.msra.mxu0 0.0
    %168 = vmatprep.subr.mxu0 0.0
    %169 = vmatpush2.msra.mxu0 0.0
    %170 = vmatprep.subr.mxu0 0.0
    %171 = vmatpush2.msra.mxu0 0.0
    %172 = vmatprep.subr.mxu0 0.0
    %173 = vmatpush2.msra.mxu0 0.0
    %174 = vmatprep.subr.mxu0 0.0
    %175 = vmatpush2.msra.mxu0 0.0
    %176 = vmatprep.subr.mxu0 0.0
    %177 = vmatpush2.msra.mxu0 0.0
    %178 = vmatprep.subr.mxu0 0.0
    %179 = vmatpush2.msra.mxu0 0.0
    %180 = vmatprep.mubr.f32.mxu0 0.0
    %181 = vmatmul.mubr.f32.gmra.mxu0 %v65
    %v182 = vpop.f32.mrf.mxu0
    %v183 = vadd.f32 0.0, %v182
    %v184 = vpop.f32.mrf.mxu0
    %185 = vmatprep.mubr.f32.mxu0 0.0
    %186 = vmatmul.mubr.f32.gmra.mxu0 %v68
    %v187 = vpop.f32.mrf.mxu0
    %v188 = vadd.f32 0.0, %v187
    %v189 = vpop.f32.mrf.mxu0
    %190 = vmatprep.mubr.f32.mxu0 0.0
    %191 = vmatmul.mubr.f32.gmra.mxu0 %v71
    %v192 = vpop.f32.mrf.mxu0
    %v193 = vadd.f32 0.0, %v192
    %v194 = vpop.f32.mrf.mxu0
    %195 = vmatprep.mubr.f32.mxu0 0.0
    %196 = vmatmul.mubr.f32.gmra.mxu0 %v74
    %v197 = vpop.f32.mrf.mxu0
    %v198 = vadd.f32 0.0, %v197
    %v199 = vpop.f32.mrf.mxu0
    %200 = vmatprep.mubr.f32.mxu0 0.0
    %201 = vmatmul.mubr.f32.gmra.mxu0 %v77
    %v202 = vpop.f32.mrf.mxu0
    %v203 = vadd.f32 0.0, %v202
    %v204 = vpop.f32.mrf.mxu0
    %205 = vmatprep.mubr.f32.mxu0 0.0
    %206 = vmatmul.mubr.f32.gmra.mxu0 %v80
    %v207 = vpop.f32.mrf.mxu0
    %v208 = vadd.f32 0.0, %v207
    %v209 = vpop.f32.mrf.mxu0
    %210 = vmatprep.mubr.f32.mxu0 0.0
    %211 = vmatmul.mubr.f32.gmra.mxu0 %v83
    %v212 = vpop.f32.mrf.mxu0
    %v213 = vadd.f32 0.0, %v212
    %v214 = vpop.f32.mrf.mxu0
    %215 = vmatprep.mubr.f32.mxu0 0.0
    %216 = vmatmul.mubr.f32.gmra.mxu0 %v86
    %v217 = vpop.f32.mrf.mxu0
    %v218 = vadd.f32 0.0, %v217
    %v219 = vpop.f32.mrf.mxu0
    %220 = vmatprep.mubr.f32.mxu0 0.0
    %221 = vmatmul.mubr.f32.gmra.mxu0 %v89
    %v222 = vpop.f32.mrf.mxu0
    %v223 = vadd.f32 0.0, %v222
    %v224 = vpop.f32.mrf.mxu0
    %225 = vmatprep.mubr.f32.mxu0 0.0
    %226 = vmatmul.mubr.f32.gmra.mxu0 %v92
    %v227 = vpop.f32.mrf.mxu0
    %v228 = vadd.f32 0.0, %v227
    %v229 = vpop.f32.mrf.mxu0
    %230 = vmatprep.mubr.f32.mxu0 0.0
    %231 = vmatmul.mubr.f32.gmra.mxu0 %v95
    %v232 = vpop.f32.mrf.mxu0
    %v233 = vadd.f32 0.0, %v232
    %v234 = vpop.f32.mrf.mxu0
    %235 = vmatprep.mubr.f32.mxu0 0.0
    %236 = vmatmul.mubr.f32.gmra.mxu0 %v98
    %v237 = vpop.f32.mrf.mxu0
    %v238 = vadd.f32 0.0, %v237
    %v239 = vpop.f32.mrf.mxu0
    %240 = vmatprep.mubr.f32.mxu0 0.0
    %241 = vmatmul.mubr.f32.gmra.mxu0 %v101
    %v242 = vpop.f32.mrf.mxu0
    %v243 = vadd.f32 0.0, %v242
    %v244 = vpop.f32.mrf.mxu0
    %245 = vmatprep.mubr.f32.mxu0 0.0
    %246 = vmatmul.mubr.f32.gmra.mxu0 %v104
    %v247 = vpop.f32.mrf.mxu0
    %v248 = vadd.f32 0.0, %v247
    %v249 = vpop.f32.mrf.mxu0
    %250 = vmatprep.mubr.f32.mxu0 0.0
    %251 = vmatmul.mubr.f32.gmra.mxu0 %v107
    %v252 = vpop.f32.mrf.mxu0
    %v253 = vadd.f32 0.0, %v252
    %v254 = vpop.f32.mrf.mxu0
    %255 = vmatprep.mubr.f32.mxu0 0.0
    %256 = vmatmul.mubr.f32.gmra.mxu0 %v110
    %v257 = vpop.f32.mrf.mxu0
    %v258 = vadd.f32 0.0, %v257
    %v259 = vpop.f32.mrf.mxu0
    %260 = vdwg.mxu0
    %vm261 = vcmask 97280
    %v263 = vsel %vm261, %v28, 0
    %v266 = vsel %vm261, %v29, 0
    %v269 = vsel %vm261, %v30, 0
    %v272 = vsel %vm261, %v31, 0
    %v275 = vsel %vm261, %v32, 0
    %v278 = vsel %vm261, %v33, 0
    %v281 = vsel %vm261, %v34, 0
    %v284 = vsel %vm261, %v35, 0
    %v287 = vsel %vm261, %v36, 0
    %v290 = vsel %vm261, %v37, 0
    %v293 = vsel %vm261, %v38, 0
    %v296 = vsel %vm261, %v39, 0
    %v299 = vsel %vm261, %v40, 0
    %v302 = vsel %vm261, %v41, 0
    %v305 = vsel %vm261, %v42, 0
    %v308 = vsel %vm261, %v43, 0
    %v311 = vsel %vm112, %v45, 0
    %313 = vmatprep.subr.mxu0 0.0
    %314 = vmatpush1.msra.mxu0 0.0
    %315 = vmatprep.subr.mxu0 0.0
    %316 = vmatpush1.msra.mxu0 0.0
    %317 = vmatprep.subr.mxu0 0.0
    %318 = vmatpush1.msra.mxu0 0.0
    %319 = vmatprep.subr.mxu0 0.0
    %320 = vmatpush1.msra.mxu0 0.0
    %321 = vmatprep.subr.mxu0 0.0
    %322 = vmatpush1.msra.mxu0 0.0
    %323 = vmatprep.subr.mxu0 0.0
    %324 = vmatpush1.msra.mxu0 0.0
    %325 = vmatprep.subr.mxu0 0.0
    %326 = vmatpush1.msra.mxu0 0.0
    %327 = vmatprep.subr.mxu0 0.0
    %328 = vmatpush1.msra.mxu0 0.0
    %329 = vmatprep.subr.mxu0 0.0
    %330 = vmatpush1.msra.mxu0 0.0
    %331 = vmatprep.subr.mxu0 0.0
    %332 = vmatpush1.msra.mxu0 0.0
    %333 = vmatprep.subr.mxu0 0.0
    %334 = vmatpush1.msra.mxu0 0.0
    %335 = vmatprep.subr.mxu0 0.0
    %336 = vmatpush1.msra.mxu0 0.0
    %337 = vmatprep.subr.mxu0 0.0
    %338 = vmatpush1.msra.mxu0 0.0
    %339 = vmatprep.subr.mxu0 0.0
    %340 = vmatpush1.msra.mxu0 0.0
    %341 = vmatprep.subr.mxu0 0.0
    %342 = vmatpush1.msra.mxu0 %v311
    %343 = vmatprep.subr.mxu0 0.0
    %344 = vmatpush1.msra.mxu0 %v44
    %345 = vmatprep.subr.mxu0 0.0
    %346 = vmatpush2.msra.mxu0 0.0
    %347 = vmatprep.subr.mxu0 0.0
    %348 = vmatpush2.msra.mxu0 0.0
    %349 = vmatprep.subr.mxu0 0.0
    %350 = vmatpush2.msra.mxu0 0.0
    %351 = vmatprep.subr.mxu0 0.0
    %352 = vmatpush2.msra.mxu0 0.0
    %353 = vmatprep.subr.mxu0 0.0
    %354 = vmatpush2.msra.mxu0 0.0
    %355 = vmatprep.subr.mxu0 0.0
    %356 = vmatpush2.msra.mxu0 0.0
    %357 = vmatprep.subr.mxu0 0.0
    %358 = vmatpush2.msra.mxu0 0.0
    %359 = vmatprep.subr.mxu0 0.0
    %360 = vmatpush2.msra.mxu0 0.0
    %361 = vmatprep.subr.mxu0 0.0
    %362 = vmatpush2.msra.mxu0 0.0
    %363 = vmatprep.subr.mxu0 0.0
    %364 = vmatpush2.msra.mxu0 0.0
    %365 = vmatprep.subr.mxu0 0.0
    %366 = vmatpush2.msra.mxu0 0.0
    %367 = vmatprep.subr.mxu0 0.0
    %368 = vmatpush2.msra.mxu0 0.0
    %369 = vmatprep.subr.mxu0 0.0
    %370 = vmatpush2.msra.mxu0 0.0
    %371 = vmatprep.subr.mxu0 0.0
    %372 = vmatpush2.msra.mxu0 0.0
    %373 = vmatprep.subr.mxu0 0.0
    %374 = vmatpush2.msra.mxu0 0.0
    %375 = vmatprep.subr.mxu0 0.0
    %376 = vmatpush2.msra.mxu0 0.0
    %377 = vmatprep.mubr.f32.mxu0 0.0
    %378 = vmatmul.mubr.f32.gmra.mxu0 %v263
    %v379 = vpop.f32.mrf.mxu0
    %v380 = vadd.f32 %v183, %v379
    %v381 = vpop.f32.mrf.mxu0
    %382 = vmatprep.mubr.f32.mxu0 0.0
    %383 = vmatmul.mubr.f32.gmra.mxu0 %v266
    %v384 = vpop.f32.mrf.mxu0
    %v385 = vadd.f32 %v188, %v384
    %v386 = vpop.f32.mrf.mxu0
    %387 = vmatprep.mubr.f32.mxu0 0.0
    %388 = vmatmul.mubr.f32.gmra.mxu0 %v269
    %v389 = vpop.f32.mrf.mxu0
    %v390 = vadd.f32 %v193, %v389
    %v391 = vpop.f32.mrf.mxu0
    %392 = vmatprep.mubr.f32.mxu0 0.0
    %393 = vmatmul.mubr.f32.gmra.mxu0 %v272
    %v394 = vpop.f32.mrf.mxu0
    %v395 = vadd.f32 %v198, %v394
    %v396 = vpop.f32.mrf.mxu0
    %397 = vmatprep.mubr.f32.mxu0 0.0
    %398 = vmatmul.mubr.f32.gmra.mxu0 %v275
    %v399 = vpop.f32.mrf.mxu0
    %v400 = vadd.f32 %v203, %v399
    %v401 = vpop.f32.mrf.mxu0
    %402 = vmatprep.mubr.f32.mxu0 0.0
    %403 = vmatmul.mubr.f32.gmra.mxu0 %v278
    %v404 = vpop.f32.mrf.mxu0
    %v405 = vadd.f32 %v208, %v404
    %v406 = vpop.f32.mrf.mxu0
    %407 = vmatprep.mubr.f32.mxu0 0.0
    %408 = vmatmul.mubr.f32.gmra.mxu0 %v281
    %v409 = vpop.f32.mrf.mxu0
    %v410 = vadd.f32 %v213, %v409
    %v411 = vpop.f32.mrf.mxu0
    %412 = vmatprep.mubr.f32.mxu0 0.0
    %413 = vmatmul.mubr.f32.gmra.mxu0 %v284
    %v414 = vpop.f32.mrf.mxu0
    %v415 = vadd.f32 %v218, %v414
    %v416 = vpop.f32.mrf.mxu0
    %417 = vmatprep.mubr.f32.mxu0 0.0
    %418 = vmatmul.mubr.f32.gmra.mxu0 %v287
    %v419 = vpop.f32.mrf.mxu0
    %v420 = vadd.f32 %v223, %v419
    %v421 = vpop.f32.mrf.mxu0
    %422 = vmatprep.mubr.f32.mxu0 0.0
    %423 = vmatmul.mubr.f32.gmra.mxu0 %v290
    %v424 = vpop.f32.mrf.mxu0
    %v425 = vadd.f32 %v228, %v424
    %v426 = vpop.f32.mrf.mxu0
    %427 = vmatprep.mubr.f32.mxu0 0.0
    %428 = vmatmul.mubr.f32.gmra.mxu0 %v293
    %v429 = vpop.f32.mrf.mxu0
    %v430 = vadd.f32 %v233, %v429
    %v431 = vpop.f32.mrf.mxu0
    %432 = vmatprep.mubr.f32.mxu0 0.0
    %433 = vmatmul.mubr.f32.gmra.mxu0 %v296
    %v434 = vpop.f32.mrf.mxu0
    %v435 = vadd.f32 %v238, %v434
    %v436 = vpop.f32.mrf.mxu0
    %437 = vmatprep.mubr.f32.mxu0 0.0
    %438 = vmatmul.mubr.f32.gmra.mxu0 %v299
    %v439 = vpop.f32.mrf.mxu0
    %v440 = vadd.f32 %v243, %v439
    %v441 = vpop.f32.mrf.mxu0
    %442 = vmatprep.mubr.f32.mxu0 0.0
    %443 = vmatmul.mubr.f32.gmra.mxu0 %v302
    %v444 = vpop.f32.mrf.mxu0
    %v445 = vadd.f32 %v248, %v444
    %v446 = vpop.f32.mrf.mxu0
    %447 = vmatprep.mubr.f32.mxu0 0.0
    %448 = vmatmul.mubr.f32.gmra.mxu0 %v305
    %v449 = vpop.f32.mrf.mxu0
    %v450 = vadd.f32 %v253, %v449
    %v451 = vpop.f32.mrf.mxu0
    %452 = vmatprep.mubr.f32.mxu0 0.0
    %453 = vmatmul.mubr.f32.gmra.mxu0 %v308
    %v454 = vpop.f32.mrf.mxu0
    %v455 = vadd.f32 %v258, %v454
    %v456 = vpop.f32.mrf.mxu0
    %457 = vdwg.mxu0
    %v458 = vld [vmem:[%s4] sm:$0x1]
    %v460 = vlaneseq
    %v461 = vshrl.u32 %v460, 7
    %v462 = vsub.s32 0, %v461
    %v463 = vrot.slane %v458, %v462
    %v465 = vadd.f32 %v380, %v463
    %v466 = vadd.f32 %v385, %v463
    %v467 = vadd.f32 %v390, %v463
    %v468 = vadd.f32 %v395, %v463
    %v469 = vadd.f32 %v400, %v463
    %v470 = vadd.f32 %v405, %v463
    %v471 = vadd.f32 %v410, %v463
    %v472 = vadd.f32 %v415, %v463
    %v473 = vadd.f32 %v420, %v463
    %v474 = vadd.f32 %v425, %v463
    %v475 = vadd.f32 %v430, %v463
    %v476 = vadd.f32 %v435, %v463
    %v477 = vadd.f32 %v440, %v463
    %v478 = vadd.f32 %v445, %v463
    %v479 = vadd.f32 %v450, %v463
    %v480 = vadd.f32 %v455, %v463
    %v481 = vmax.f32 %v465, 0.0
    %v482 = vmax.f32 %v466, 0.0
    %v483 = vmax.f32 %v467, 0.0
    %v484 = vmax.f32 %v468, 0.0
    %v485 = vmax.f32 %v469, 0.0
    %v486 = vmax.f32 %v470, 0.0
    %v487 = vmax.f32 %v471, 0.0
    %v488 = vmax.f32 %v472, 0.0
    %v489 = vmax.f32 %v473, 0.0
    %v490 = vmax.f32 %v474, 0.0
    %v491 = vmax.f32 %v475, 0.0
    %v492 = vmax.f32 %v476, 0.0
    %v493 = vmax.f32 %v477, 0.0
    %v494 = vmax.f32 %v478, 0.0
    %v495 = vmax.f32 %v479, 0.0
    %v496 = vmax.f32 %v480, 0.0
    %v497 = vld [vmem:[%s5] sm:$0x1]
    %v499 = vlaneseq
    %v500 = vshrl.u32 %v499, 7
    %v501 = vsub.s32 0, %v500
    %v502 = vrot.slane %v497, %v501
    %v504 = vmul.f32 %v481, %v502
    %v505 = vmul.f32 %v482, %v502
    %v506 = vmul.f32 %v483, %v502
    %v507 = vmul.f32 %v484, %v502
    %v508 = vmul.f32 %v485, %v502
    %v509 = vmul.f32 %v486, %v502
    %v510 = vmul.f32 %v487, %v502
    %v511 = vmul.f32 %v488, %v502
    %v512 = vmul.f32 %v489, %v502
    %v513 = vmul.f32 %v490, %v502
    %v514 = vmul.f32 %v491, %v502
    %v515 = vmul.f32 %v492, %v502
    %v516 = vmul.f32 %v493, %v502
    %v517 = vmul.f32 %v494, %v502
    %v518 = vmul.f32 %v495, %v502
    %v519 = vmul.f32 %v496, %v502
    %vm520 = vcmask 261120
    %v521 = vsel %vm520, %v504, 0.0
    %522 = vadd.xlane.f32.xlu0 %v521
    %v523 = vpop.xlane.xlu0 %522
    %v524 = vsel %vm520, %v505, 0.0
    %525 = vadd.xlane.f32.xlu0 %v524
    %v526 = vpop.xlane.xlu0 %525
    %v527 = vsel %vm520, %v506, 0.0
    %528 = vadd.xlane.f32.xlu0 %v527
    %v529 = vpop.xlane.xlu0 %528
    %v530 = vsel %vm520, %v507, 0.0
    %531 = vadd.xlane.f32.xlu0 %v530
    %v532 = vpop.xlane.xlu0 %531
    %v533 = vsel %vm520, %v508, 0.0
    %534 = vadd.xlane.f32.xlu0 %v533
    %v535 = vpop.xlane.xlu0 %534
    %v536 = vsel %vm520, %v509, 0.0
    %537 = vadd.xlane.f32.xlu0 %v536
    %v538 = vpop.xlane.xlu0 %537
    %v539 = vsel %vm520, %v510, 0.0
    %540 = vadd.xlane.f32.xlu0 %v539
    %v541 = vpop.xlane.xlu0 %540
    %v542 = vsel %vm520, %v511, 0.0
    %543 = vadd.xlane.f32.xlu0 %v542
    %v544 = vpop.xlane.xlu0 %543
    %v545 = vsel %vm520, %v512, 0.0
    %546 = vadd.xlane.f32.xlu0 %v545
    %v547 = vpop.xlane.xlu0 %546
    %v548 = vsel %vm520, %v513, 0.0
    %549 = vadd.xlane.f32.xlu0 %v548
    %v550 = vpop.xlane.xlu0 %549
    %v551 = vsel %vm520, %v514, 0.0
    %552 = vadd.xlane.f32.xlu0 %v551
    %v553 = vpop.xlane.xlu0 %552
    %v554 = vsel %vm520, %v515, 0.0
    %555 = vadd.xlane.f32.xlu0 %v554
    %v556 = vpop.xlane.xlu0 %555
    %v557 = vsel %vm520, %v516, 0.0
    %558 = vadd.xlane.f32.xlu0 %v557
    %v559 = vpop.xlane.xlu0 %558
    %v560 = vsel %vm520, %v517, 0.0
    %561 = vadd.xlane.f32.xlu0 %v560
    %v562 = vpop.xlane.xlu0 %561
    %v563 = vsel %vm520, %v518, 0.0
    %564 = vadd.xlane.f32.xlu0 %v563
    %v565 = vpop.xlane.xlu0 %564
    %v566 = vsel %vm520, %v519, 0.0
    %567 = vadd.xlane.f32.xlu0 %v566
    %v568 = vpop.xlane.xlu0 %567
    %s569 = sld [smem:[#allocation2]]
    %v570 = vstv %s569
    %v571 = vadd.f32 %v523, %v570
    %v572 = vadd.f32 %v526, %v570
    %v573 = vadd.f32 %v529, %v570
    %v574 = vadd.f32 %v532, %v570
    %v575 = vadd.f32 %v535, %v570
    %v576 = vadd.f32 %v538, %v570
    %v577 = vadd.f32 %v541, %v570
    %v578 = vadd.f32 %v544, %v570
    %v579 = vadd.f32 %v547, %v570
    %v580 = vadd.f32 %v550, %v570
    %v581 = vadd.f32 %v553, %v570
    %v582 = vadd.f32 %v556, %v570
    %v583 = vadd.f32 %v559, %v570
    %v584 = vadd.f32 %v562, %v570
    %v585 = vadd.f32 %v565, %v570
    %v586 = vadd.f32 %v568, %v570
    %v603 = vlaneseq
    %v604 = vand.u32 %v603, 127
    %v605 = vlaneseq
    %v606 = vshrl.u32 %v605, 7
    %v607 = vsub.s32 %v604, %v606
    %v608 = vrot.slane %v571, %v607
    %v609 = vadd.s32 %v604, 4294967288
    %v610 = vlaneseq
    %v611 = vshrl.u32 %v610, 7
    %v612 = vsub.s32 %v609, %v611
    %v613 = vrot.slane %v572, %v612
    %vm614 = vcmask 130112
    %v615 = vsel %vm614, %v613, %v608
    %v616 = vadd.s32 %v604, 4294967280
    %v617 = vlaneseq
    %v618 = vshrl.u32 %v617, 7
    %v619 = vsub.s32 %v616, %v618
    %v620 = vrot.slane %v573, %v619
    %vm621 = vcmask 195712
    %v622 = vsel %vm621, %v620, %v615
    %v623 = vadd.s32 %v604, 4294967272
    %v624 = vlaneseq
    %v625 = vshrl.u32 %v624, 7
    %v626 = vsub.s32 %v623, %v625
    %v627 = vrot.slane %v574, %v626
    %vm628 = vcmask 261312
    %v629 = vsel %vm628, %v627, %v622
    %v630 = vadd.s32 %v604, 4294967264
    %v631 = vlaneseq
    %v632 = vshrl.u32 %v631, 7
    %v633 = vsub.s32 %v630, %v632
    %v634 = vrot.slane %v575, %v633
    %vm635 = vcmask 326912
    %v636 = vsel %vm635, %v634, %v629
    %v637 = vadd.s32 %v604, 4294967256
    %v638 = vlaneseq
    %v639 = vshrl.u32 %v638, 7
    %v640 = vsub.s32 %v637, %v639
    %v641 = vrot.slane %v576, %v640
    %vm642 = vcmask 392512
    %v643 = vsel %vm642, %v641, %v636
    %v644 = vadd.s32 %v604, 4294967248
    %v645 = vlaneseq
    %v646 = vshrl.u32 %v645, 7
    %v647 = vsub.s32 %v644, %v646
    %v648 = vrot.slane %v577, %v647
    %vm649 = vcmask 458112
    %v650 = vsel %vm649, %v648, %v643
    %v651 = vadd.s32 %v604, 4294967240
    %v652 = vlaneseq
    %v653 = vshrl.u32 %v652, 7
    %v654 = vsub.s32 %v651, %v653
    %v655 = vrot.slane %v578, %v654
    %vm656 = vcmask 523712
    %v657 = vsel %vm656, %v655, %v650
    %v658 = vadd.s32 %v604, 4294967232
    %v659 = vlaneseq
    %v660 = vshrl.u32 %v659, 7
    %v661 = vsub.s32 %v658, %v660
    %v662 = vrot.slane %v579, %v661
    %vm663 = vcmask 589312
    %v664 = vsel %vm663, %v662, %v657
    %v665 = vadd.s32 %v604, 4294967224
    %v666 = vlaneseq
    %v667 = vshrl.u32 %v666, 7
    %v668 = vsub.s32 %v665, %v667
    %v669 = vrot.slane %v580, %v668
    %vm670 = vcmask 654912
    %v671 = vsel %vm670, %v669, %v664
    %v672 = vadd.s32 %v604, 4294967216
    %v673 = vlaneseq
    %v674 = vshrl.u32 %v673, 7
    %v675 = vsub.s32 %v672, %v674
    %v676 = vrot.slane %v581, %v675
    %vm677 = vcmask 720512
    %v678 = vsel %vm677, %v676, %v671
    %v679 = vadd.s32 %v604, 4294967208
    %v680 = vlaneseq
    %v681 = vshrl.u32 %v680, 7
    %v682 = vsub.s32 %v679, %v681
    %v683 = vrot.slane %v582, %v682
    %vm684 = vcmask 786112
    %v685 = vsel %vm684, %v683, %v678
    %v686 = vadd.s32 %v604, 4294967200
    %v687 = vlaneseq
    %v688 = vshrl.u32 %v687, 7
    %v689 = vsub.s32 %v686, %v688
    %v690 = vrot.slane %v583, %v689
    %vm691 = vcmask 851712
    %v692 = vsel %vm691, %v690, %v685
    %v693 = vadd.s32 %v604, 4294967192
    %v694 = vlaneseq
    %v695 = vshrl.u32 %v694, 7
    %v696 = vsub.s32 %v693, %v695
    %v697 = vrot.slane %v584, %v696
    %vm698 = vcmask 917312
    %v699 = vsel %vm698, %v697, %v692
    %v700 = vadd.s32 %v604, 4294967184
    %v701 = vlaneseq
    %v702 = vshrl.u32 %v701, 7
    %v703 = vsub.s32 %v700, %v702
    %v704 = vrot.slane %v585, %v703
    %vm705 = vcmask 982912
    %v706 = vsel %vm705, %v704, %v699
    %v707 = vadd.s32 %v604, 4294967176
    %v708 = vlaneseq
    %v709 = vshrl.u32 %v708, 7
    %v710 = vsub.s32 %v707, %v709
    %v711 = vrot.slane %v586, %v710
    %vm712 = vcmask 1048512
    %v713 = vsel %vm712, %v711, %v706
    %715 = vst [vmem:[#allocation3] sm:$0x1] %v713
    // Predicated region
    $region30: #{tpu_custom_call.1} parent=1 // pred_check
      _
    $region31: #{tpu_custom_call.1} parent=1 // pred_check_branch
      %717 = sbr.rel (0) target = $region33
    $region32: #{tpu_custom_call.1} parent=1 // pred_region
      %s719 = ssub.s32 16, 16
      %720 = vsyncadd [#allocation4], %s719
      %s722 = sshll.u32 [#allocation3], 4
      %s723 = int_to_ptr.vmem [resolvable:$true] %s722
      %725 = dma.vmem_to_hbm [thread:$0]  %s723, 16, %s7, [#allocation4]
    $region33: #{tpu_custom_call.1} parent=1 // pred_fallthru
      _
    // Predicated region
    $region34: #{tpu_custom_call.1} parent=1 // pred_check
      _
    $region35: #{tpu_custom_call.1} parent=1 // pred_check_branch
      %727 = sbr.rel (0) target = $region37
    $region36: #{tpu_custom_call.1} parent=1 // pred_region
      %728 = dma.done [#allocation4], 16
    $region37: #{tpu_custom_call.1} parent=1 // pred_fallthru
      _
    %729 = vsyncpa [#allocation4], 1

</llo_original>
